<compile_context>
chip_gen: v6e
topology: v6e:2x2x1
jax: 0.10.0
libtpu: 0.0.40
codegen_flags: <defaults>
</compile_context>

<pallas_src>
import jax
import jax.numpy as jnp
from jax.experimental import pallas as pl
from jax.experimental.pallas import tpu as pltpu

BN_EPS = 1e-5
GIN_EPS = 0.0  # PyG GINConv default eps


# ---------------------------------------------------------------------------
# Kernel
# ---------------------------------------------------------------------------
def _make_encoder_kernel(n_pad, n_real, cw, dim):
    """Fused per-layer kernel body (grid axis = layer index)."""
    inv_n = 1.0 / float(n_real)
    lane_w = 4 * cw      # packed activation width (lanes)
    out_w = 4 * dim      # packed MLP output width (lanes)

    def kernel(adj0_ref, adj1_ref, x_ref, pool_ref,
               w1_ref, w2_ref, b1_ref, b2_ref, gamma_ref, beta_ref,
               out_ref, h_ref):
        l = pl.program_id(0)

        # Layer 0: seed the carried activations from the packed inputs.
        @pl.when(l == 0)
        def _():
            h_ref[...] = x_ref[...]

        h = h_ref[...]                               # [Npad, 4*CW] f32
        hb = h.astype(jnp.bfloat16)

        # --- GIN aggregation.  Full-lane matmuls (extra lanes are free on the
        #     MXU); lane-select keeps A0 for branch 0 and A1 for branch 1.
        m0 = jnp.dot(adj0_ref[...], hb, preferred_element_type=jnp.float32)
        m1 = jnp.dot(adj1_ref[...], hb, preferred_element_type=jnp.float32)

        lane = jax.lax.broadcasted_iota(jnp.int32, (n_pad, lane_w), 1)
        msg = jnp.where(lane < cw, m0,
                        jnp.where(lane < 2 * cw, m1, jnp.float32(0.0)))
        # identity-adjacency branches: (1+eps)*h + I@h == (2+eps)*h
        self_scale = jnp.where(lane < 2 * cw,
                               jnp.float32(1.0 + GIN_EPS),
                               jnp.float32(2.0 + GIN_EPS))
        agg = h * self_scale + msg                   # [Npad, 4*CW] f32

        # --- shared MLP (block-diag bf16 weights): Linear -> ReLU -> Linear,
        #     then the outer F.relu from Encoder.forward.
        z = jnp.dot(agg.astype(jnp.bfloat16), w1_ref[0],
                    preferred_element_type=jnp.float32) + b1_ref[0]
        z = jnp.maximum(z, 0.0)
        z = jnp.dot(z.astype(jnp.bfloat16), w2_ref[0],
                    preferred_element_type=jnp.float32) + b2_ref[0]
        z = jnp.maximum(z, 0.0)                      # [Npad, 4*dim] f32

        # --- BatchNorm1d (training-mode batch stats), all 4 branches at once,
        #     real rows only (padded rows masked out).
        row = jax.lax.broadcasted_iota(jnp.int32, (n_pad, out_w), 0)
        rmask = (row < n_real).astype(jnp.float32)
        zm = z * rmask
        mean = jnp.sum(zm, axis=0, keepdims=True) * inv_n
        d = (z - mean) * rmask
        var = jnp.sum(d * d, axis=0, keepdims=True) * inv_n
        zn = d * jax.lax.rsqrt(var + BN_EPS) * gamma_ref[0] + beta_ref[0]

        # --- carry activations to the next layer.
        if cw == dim:
            h_ref[...] = zn
        else:
            # num_features > dim: re-embed each branch's dim lanes into its
            # cw-wide lane group (only taken when F > D; untested path cheap).
            h_ref[...] = jnp.zeros_like(h_ref)
            for b in range(4):
                h_ref[:, b * cw:b * cw + dim] = zn[:, b * dim:(b + 1) * dim]

        # --- global_add_pool for all 4 branches in one lane-dense matmul.
        out_ref[0] = jnp.dot(pool_ref[...], zn.astype(jnp.bfloat16),
                             preferred_element_type=jnp.float32)   # [G, 4*dim]

    return kernel


# ---------------------------------------------------------------------------
# Host-side helpers
# ---------------------------------------------------------------------------
def init_params(key, num_features, dim, num_gc_layers):
    """Deterministic parameter init mirroring the module's __init__ shapes."""
    params = []
    for i in range(num_gc_layers):
        fin = num_features if i == 0 else dim
        key, k1, k2, k3, k4 = jax.random.split(key, 5)
        # stored as [in, out] so the kernel does x @ W
        w1 = jax.random.normal(k1, (fin, dim), jnp.float32) * (1.0 / jnp.sqrt(fin))
        b1 = jax.random.normal(k2, (1, dim), jnp.float32) * 0.01
        w2 = jax.random.normal(k3, (dim, dim), jnp.float32) * (1.0 / jnp.sqrt(dim))
        b2 = jax.random.normal(k4, (1, dim), jnp.float32) * 0.01
        gamma = jnp.ones((1, dim), jnp.float32)   # BatchNorm1d default weight
        beta = jnp.zeros((1, dim), jnp.float32)   # BatchNorm1d default bias
        params.append((w1, b1, w2, b2, gamma, beta))
    return params


def edge_index_to_adj(edge_index, num_nodes):
    # A[i, j] = #edges j -> i  (source_to_target message flow)
    a = jnp.zeros((num_nodes, num_nodes), jnp.float32)
    return a.at[edge_index[1], edge_index[0]].add(1.0)


def batch_to_pool(batch, num_graphs, num_nodes):
    # P[g, i] = 1 if node i is in graph g (columns for padded nodes stay 0)
    n = batch.shape[0]
    p = jnp.zeros((num_graphs, num_nodes), jnp.float32)
    return p.at[batch, jnp.arange(n)].add(1.0)


def _block_diag4(blk):
    a, b = blk.shape
    out = jnp.zeros((4 * a, 4 * b), blk.dtype)
    for i in range(4):
        out = out.at[i * a:(i + 1) * a, i * b:(i + 1) * b].set(blk)
    return out


def _vmem_limit_bytes():
    """Generation-aware scoped-VMEM budget with headroom."""
    try:
        cap = int(pltpu.get_tpu_info().vmem_capacity_bytes)
    except Exception:
        cap = 64 * 1024 * 1024
    return max(32 * 1024 * 1024, cap - 12 * 1024 * 1024)


# ---------------------------------------------------------------------------
# Forward wrapper
# ---------------------------------------------------------------------------
def encoder_forward(params, x, aug_x, edge_index, aug_edge_index, batch,
                    num_graphs):
    n, num_features = x.shape
    num_layers = len(params)
    dim = params[0][0].shape[1]
    cw = max(num_features, dim)            # per-branch lane-group width
    n_pad = ((n + 15) // 16) * 16          # bf16 sublane granule

    # Integer edge counts / 0-1 pool entries are exact in bf16.
    adj0 = edge_index_to_adj(edge_index, n_pad).astype(jnp.bfloat16)
    adj1 = edge_index_to_adj(aug_edge_index, n_pad).astype(jnp.bfloat16)
    pool = batch_to_pool(batch, num_graphs, n_pad).astype(jnp.bfloat16)

    # Lane-packed node features: [x | x | x | aug_x], zero-padded rows/lanes.
    xp = jnp.zeros((n_pad, 4 * cw), jnp.float32)
    for b, src in enumerate((x, x, x, aug_x)):
        xp = xp.at[:n, b * cw:b * cw + num_features].set(src)

    # Stacked, block-diagonal, host-cast bf16 weights; lane-tiled BN params.
    w1s, w2s, b1s, b2s, gms, bts = [], [], [], [], [], []
    for (w1, b1, w2, b2, gamma, beta) in params:
        fin = w1.shape[0]
        blk1 = jnp.zeros((cw, dim), jnp.float32).at[:fin, :].set(w1)
        w1s.append(_block_diag4(blk1))
        w2s.append(_block_diag4(w2))
        b1s.append(jnp.tile(b1, (1, 4)))
        b2s.append(jnp.tile(b2, (1, 4)))
        gms.append(jnp.tile(gamma, (1, 4)))
        bts.append(jnp.tile(beta, (1, 4)))
    w1s = jnp.stack(w1s).astype(jnp.bfloat16)   # [L, 4*CW, 4*dim]
    w2s = jnp.stack(w2s).astype(jnp.bfloat16)   # [L, 4*dim, 4*dim]
    b1s = jnp.stack(b1s)                        # [L, 1, 4*dim]
    b2s = jnp.stack(b2s)
    gms = jnp.stack(gms)
    bts = jnp.stack(bts)

    kernel = _make_encoder_kernel(n_pad, n, cw, dim)

    resident2 = lambda shape: pl.BlockSpec(shape, lambda l: (0, 0))
    per_layer = lambda shape: pl.BlockSpec((1,) + shape, lambda l: (l, 0, 0))

    grid_spec = pltpu.PrefetchScalarGridSpec(
        num_scalar_prefetch=0,
        grid=(num_layers,),
        in_specs=[
            resident2((n_pad, n_pad)),            # adj0
            resident2((n_pad, n_pad)),            # adj1
            resident2((n_pad, 4 * cw)),           # packed x
            resident2((num_graphs, n_pad)),       # pool
            per_layer((4 * cw, 4 * dim)),         # w1 (block-diag, bf16)
            per_layer((4 * dim, 4 * dim)),        # w2 (block-diag, bf16)
            per_layer((1, 4 * dim)),              # b1
            per_layer((1, 4 * dim)),              # b2
            per_layer((1, 4 * dim)),              # gamma
            per_layer((1, 4 * dim)),              # beta
        ],
        out_specs=pl.BlockSpec((1, num_graphs, 4 * dim), lambda l: (l, 0, 0)),
        scratch_shapes=[pltpu.VMEM((n_pad, 4 * cw), jnp.float32)],
    )

    flops = num_layers * (
        2 * 2 * n_pad * n_pad * 4 * cw            # two aggregation matmuls
        + 2 * n_pad * 4 * cw * 4 * dim            # MLP linear 1
        + 2 * n_pad * 4 * dim * 4 * dim           # MLP linear 2
        + 2 * num_graphs * n_pad * 4 * dim        # pooling
    )
    bytes_accessed = (
        2 * n_pad * n_pad * 2 + n_pad * 4 * cw * 4 + num_graphs * n_pad * 2
        + w1s.size * 2 + w2s.size * 2 + 4 * num_layers * 4 * dim * 4
        + num_layers * num_graphs * 4 * dim * 4
    )
    cost = pl.CostEstimate(flops=int(flops),
                           transcendentals=int(num_layers * 4 * dim),
                           bytes_accessed=int(bytes_accessed))

    out = pl.pallas_call(
        kernel,
        out_shape=jax.ShapeDtypeStruct((num_layers, num_graphs, 4 * dim),
                                       jnp.float32),
        grid_spec=grid_spec,
        compiler_params=pltpu.CompilerParams(
            dimension_semantics=("arbitrary",),
            vmem_limit_bytes=_vmem_limit_bytes()),
        cost_estimate=cost,
    )(adj0, adj1, xp, pool, w1s, w2s, b1s, b2s, gms, bts)

    # [L, G, 4*dim] -> per-branch [G, L*dim], layer-major (torch.cat order).
    out = out.reshape(num_layers, num_graphs, 4, dim)
    out = jnp.transpose(out, (2, 1, 0, 3)).reshape(4, num_graphs,
                                                   num_layers * dim)
    return out[0], out[1], out[2], out[3]


# ---------------------------------------------------------------------------
# Pure-JAX reference (same bf16 MXU feed points as the kernel)
# ---------------------------------------------------------------------------
def encoder_reference(params, x, aug_x, edge_index, aug_edge_index, batch,
                      num_graphs):
    n = x.shape[0]
    adj = edge_index_to_adj(edge_index, n).astype(jnp.bfloat16)
    aug_adj = edge_index_to_adj(aug_edge_index, n).astype(jnp.bfloat16)
    pool = batch_to_pool(batch, num_graphs, n).astype(jnp.bfloat16)

    def branch(x0, a, identity):
        h = x0
        pooled = []
        for (w1, b1, w2, b2, gamma, beta) in params:
            if identity:
                agg = (2.0 + GIN_EPS) * h
            else:
                agg = (1.0 + GIN_EPS) * h + jnp.dot(
                    a, h.astype(jnp.bfloat16),
                    preferred_element_type=jnp.float32)
            z = jnp.dot(agg.astype(jnp.bfloat16), w1.astype(jnp.bfloat16),
                        preferred_element_type=jnp.float32) + b1
            z = jnp.maximum(z, 0.0)
            z = jnp.dot(z.astype(jnp.bfloat16), w2.astype(jnp.bfloat16),
                        preferred_element_type=jnp.float32) + b2
            z = jnp.maximum(z, 0.0)
            mean = jnp.mean(z, axis=0, keepdims=True)
            var = jnp.mean((z - mean) ** 2, axis=0, keepdims=True)
            z = (z - mean) * jax.lax.rsqrt(var + BN_EPS) * gamma + beta
            h = z
            pooled.append(jnp.dot(pool, z.astype(jnp.bfloat16),
                                  preferred_element_type=jnp.float32))
        return jnp.concatenate(pooled, axis=1)

    return (branch(x, adj, False), branch(x, aug_adj, False),
            branch(x, None, True), branch(aug_x, None, True))


# ---------------------------------------------------------------------------
if __name__ == "__main__":
    num_features = 32
    dim = 32
    num_gc_layers = 3
    num_nodes = 16
    num_graphs = 2
    num_edges = 40

    key = jax.random.PRNGKey(0)
    key, kx, kax, ke, kae = jax.random.split(key, 5)

    x = jax.random.normal(kx, (num_nodes, num_features), jnp.float32)
    aug_x = x + 0.1 * jax.random.normal(kax, (num_nodes, num_features),
                                        jnp.float32)

    edge_index = jax.random.randint(ke, (2, num_edges), 0, num_nodes, jnp.int32)
    aug_edge_index = jax.random.randint(kae, (2, num_edges), 0, num_nodes,
                                        jnp.int32)

    # nodes 0..7 -> graph 0, nodes 8..15 -> graph 1
    batch = jnp.concatenate([jnp.zeros(8, jnp.int32), jnp.ones(8, jnp.int32)])

    params = init_params(jax.random.PRNGKey(42), num_features, dim,
                         num_gc_layers)

    fwd = jax.jit(encoder_forward, static_argnames=("num_graphs",))
    outs = fwd(params, x, aug_x, edge_index, aug_edge_index, batch,
               num_graphs=num_graphs)
    outs = jax.block_until_ready(outs)

    expected_shape = (num_graphs, dim * num_gc_layers)
    assert all(o.shape == expected_shape for o in outs), [o.shape for o in outs]
    assert all(bool(jnp.isfinite(o).all()) for o in outs)

    # Correctness vs a pure-JAX reference with the same bf16-fed matmuls.
    refs = encoder_reference(params, x, aug_x, edge_index, aug_edge_index,
                             batch, num_graphs)
    for o, r in zip(outs, refs):
        assert bool(jnp.allclose(o, r, atol=5e-2, rtol=5e-2)), \
            float(jnp.max(jnp.abs(o - r)))

    print("KERNEL_OK")
</pallas_src>

<mosaic_0001>
module attributes {stable_mosaic.version = 11 : i64} {
  func.func private @main(%arg0: i32) attributes {dimension_semantics = [#tpu.dimension_semantics<core_parallel>], iteration_bounds = array<i64: 2>, tpu.core_type = #tpu.core_type<sc_scalar_subcore>, window_params = []} {
    return
  }
}

module attributes {stable_mosaic.version = 11 : i64} {
  func.func private @main(%arg0: i32) attributes {dimension_semantics = [#tpu.dimension_semantics<core_parallel>], iteration_bounds = array<i64: 2>, tpu.core_type = #tpu.core_type<sc_scalar_subcore>, window_params = []} {
    return
  }
}

module attributes {stable_mosaic.version = 11 : i64} {
  func.func @kernel(%arg0: i32, %arg1: memref<16x16xbf16, #tpu.memory_space<vmem>>, %arg2: memref<16x16xbf16, #tpu.memory_space<vmem>>, %arg3: memref<16x128xf32, #tpu.memory_space<vmem>>, %arg4: memref<2x16xbf16, #tpu.memory_space<vmem>>, %arg5: memref<1x128x128xbf16, #tpu.memory_space<vmem>>, %arg6: memref<1x128x128xbf16, #tpu.memory_space<vmem>>, %arg7: memref<1x1x128xf32, #tpu.memory_space<vmem>>, %arg8: memref<1x1x128xf32, #tpu.memory_space<vmem>>, %arg9: memref<1x1x128xf32, #tpu.memory_space<vmem>>, %arg10: memref<1x1x128xf32, #tpu.memory_space<vmem>>, %arg11: memref<1x2x128xf32, #tpu.memory_space<vmem>>, %arg12: memref<16x128xf32, #tpu.memory_space<vmem>>) attributes {dimension_semantics = [#tpu.dimension_semantics<arbitrary>], iteration_bounds = array<i64: 3>, scalar_prefetch = 0 : i64, scratch_operands = 1 : i64, tpu.core_type = #tpu.core_type<tc>, window_params = [{pipeline_mode = #tpu.pipeline_mode<synchronous>, transform_indices = @transform_0, window_bounds = array<i64: 16, 16>}, {pipeline_mode = #tpu.pipeline_mode<synchronous>, transform_indices = @transform_1, window_bounds = array<i64: 16, 16>}, {pipeline_mode = #tpu.pipeline_mode<synchronous>, transform_indices = @transform_2, window_bounds = array<i64: 16, 128>}, {pipeline_mode = #tpu.pipeline_mode<synchronous>, transform_indices = @transform_3, window_bounds = array<i64: 2, 16>}, {transform_indices = @transform_4, window_bounds = array<i64: 1, 128, 128>}, {transform_indices = @transform_5, window_bounds = array<i64: 1, 128, 128>}, {transform_indices = @transform_6, window_bounds = array<i64: 1, 1, 128>}, {transform_indices = @transform_7, window_bounds = array<i64: 1, 1, 128>}, {transform_indices = @transform_8, window_bounds = array<i64: 1, 1, 128>}, {transform_indices = @transform_9, window_bounds = array<i64: 1, 1, 128>}, {transform_indices = @transform_10, window_bounds = array<i64: 1, 2, 128>}]} {
    %c0_i32 = arith.constant 0 : i32
    %0 = arith.cmpi eq, %arg0, %c0_i32 : i32
    %1 = arith.extui %0 : i1 to i32
    %c0_i32_0 = arith.constant 0 : i32
    %2 = arith.cmpi ne, %1, %c0_i32_0 : i32
    scf.if %2 {
      %c0_46 = arith.constant 0 : index
      %c0_47 = arith.constant 0 : index
      %82 = vector.load %arg3[%c0_46, %c0_47] : memref<16x128xf32, #tpu.memory_space<vmem>>, vector<16x128xf32>
      %c0_48 = arith.constant 0 : index
      %c0_49 = arith.constant 0 : index
      %83 = vector.load %arg12[%c0_48, %c0_49] : memref<16x128xf32, #tpu.memory_space<vmem>>, vector<16x128xf32>
      tpu.vector_store %arg12[%c0_48, %c0_49], %82 {strides = array<i32>} : memref<16x128xf32, #tpu.memory_space<vmem>>, vector<16x128xf32>,
    } else {
    }
    %c0 = arith.constant 0 : index
    %c0_1 = arith.constant 0 : index
    %3 = vector.load %arg12[%c0, %c0_1] : memref<16x128xf32, #tpu.memory_space<vmem>>, vector<16x128xf32>
    %4 = arith.truncf %3 : vector<16x128xf32> to vector<16x128xbf16>
    %c0_2 = arith.constant 0 : index
    %c0_3 = arith.constant 0 : index
    %5 = vector.load %arg1[%c0_2, %c0_3] : memref<16x16xbf16, #tpu.memory_space<vmem>>, vector<16x16xbf16>
    %cst = arith.constant dense<0.000000e+00> : vector<16x128xf32>
    %6 = tpu.matmul %5, %4, %cst {dimension_numbers = #tpu.dot_dimension_numbers<[1], [0], [0], [1], [0, 0, 1, 1], [], []>} : vector<16x16xbf16>, vector<16x128xbf16>, vector<16x128xf32> -> vector<16x128xf32>
    %c0_4 = arith.constant 0 : index
    %c0_5 = arith.constant 0 : index
    %7 = vector.load %arg2[%c0_4, %c0_5] : memref<16x16xbf16, #tpu.memory_space<vmem>>, vector<16x16xbf16>
    %cst_6 = arith.constant dense<0.000000e+00> : vector<16x128xf32>
    %8 = tpu.matmul %7, %4, %cst_6 {dimension_numbers = #tpu.dot_dimension_numbers<[1], [0], [0], [1], [0, 0, 1, 1], [], []>} : vector<16x16xbf16>, vector<16x128xbf16>, vector<16x128xf32> -> vector<16x128xf32>
    %9 = tpu.iota {dimensions = array<i32: 1>} : vector<16x128xi32>
    %c32_i32 = arith.constant 32 : i32
    %10 = vector.broadcast %c32_i32 : i32 to vector<16x128xi32>
    %11 = arith.cmpi slt, %9, %10 : vector<16x128xi32>
    %c64_i32 = arith.constant 64 : i32
    %12 = vector.broadcast %c64_i32 : i32 to vector<16x128xi32>
    %13 = arith.cmpi slt, %9, %12 : vector<16x128xi32>
    %cst_7 = arith.constant 0.000000e+00 : f32
    %14 = vector.broadcast %cst_7 : f32 to vector<16x128xf32>
    %15 = arith.select %13, %8, %14 : vector<16x128xi1>, vector<16x128xf32>
    %16 = arith.select %11, %6, %15 : vector<16x128xi1>, vector<16x128xf32>
    %c64_i32_8 = arith.constant 64 : i32
    %17 = vector.broadcast %c64_i32_8 : i32 to vector<16x128xi32>
    %18 = arith.cmpi slt, %9, %17 : vector<16x128xi32>
    %cst_9 = arith.constant 1.000000e+00 : f32
    %cst_10 = arith.constant 2.000000e+00 : f32
    %19 = vector.broadcast %cst_9 : f32 to vector<16x128xf32>
    %20 = vector.broadcast %cst_10 : f32 to vector<16x128xf32>
    %21 = arith.select %18, %19, %20 : vector<16x128xi1>, vector<16x128xf32>
    %22 = arith.mulf %3, %21 : vector<16x128xf32>
    %23 = arith.addf %22, %16 : vector<16x128xf32>
    %24 = arith.truncf %23 : vector<16x128xf32> to vector<16x128xbf16>
    %c0_11 = arith.constant 0 : index
    %c0_12 = arith.constant 0 : index
    %c0_13 = arith.constant 0 : index
    %25 = vector.load %arg5[%c0_11, %c0_12, %c0_13] : memref<1x128x128xbf16, #tpu.memory_space<vmem>>, vector<1x128x128xbf16>
    %26 = vector.shape_cast %25 : vector<1x128x128xbf16> to vector<128x128xbf16>
    %cst_14 = arith.constant dense<0.000000e+00> : vector<16x128xf32>
    %27 = tpu.matmul %24, %26, %cst_14 {dimension_numbers = #tpu.dot_dimension_numbers<[1], [0], [0], [1], [0, 0, 1, 1], [], []>} : vector<16x128xbf16>, vector<128x128xbf16>, vector<16x128xf32> -> vector<16x128xf32>
    %c0_15 = arith.constant 0 : index
    %c0_16 = arith.constant 0 : index
    %c0_17 = arith.constant 0 : index
    %28 = vector.load %arg7[%c0_15, %c0_16, %c0_17] : memref<1x1x128xf32, #tpu.memory_space<vmem>>, vector<1x1x128xf32>
    %29 = vector.shape_cast %28 : vector<1x1x128xf32> to vector<1x128xf32>
    %30 = vector.broadcast %29 : vector<1x128xf32> to vector<16x128xf32>
    %31 = arith.addf %27, %30 : vector<16x128xf32>
    %cst_18 = arith.constant 0.000000e+00 : f32
    %32 = vector.broadcast %cst_18 : f32 to vector<16x128xf32>
    %33 = arith.maximumf %31, %32 : vector<16x128xf32>
    %34 = arith.truncf %33 : vector<16x128xf32> to vector<16x128xbf16>
    %c0_19 = arith.constant 0 : index
    %c0_20 = arith.constant 0 : index
    %c0_21 = arith.constant 0 : index
    %35 = vector.load %arg6[%c0_19, %c0_20, %c0_21] : memref<1x128x128xbf16, #tpu.memory_space<vmem>>, vector<1x128x128xbf16>
    %36 = vector.shape_cast %35 : vector<1x128x128xbf16> to vector<128x128xbf16>
    %cst_22 = arith.constant dense<0.000000e+00> : vector<16x128xf32>
    %37 = tpu.matmul %34, %36, %cst_22 {dimension_numbers = #tpu.dot_dimension_numbers<[1], [0], [0], [1], [0, 0, 1, 1], [], []>} : vector<16x128xbf16>, vector<128x128xbf16>, vector<16x128xf32> -> vector<16x128xf32>
    %c0_23 = arith.constant 0 : index
    %c0_24 = arith.constant 0 : index
    %c0_25 = arith.constant 0 : index
    %38 = vector.load %arg8[%c0_23, %c0_24, %c0_25] : memref<1x1x128xf32, #tpu.memory_space<vmem>>, vector<1x1x128xf32>
    %39 = vector.shape_cast %38 : vector<1x1x128xf32> to vector<1x128xf32>
    %40 = vector.broadcast %39 : vector<1x128xf32> to vector<16x128xf32>
    %41 = arith.addf %37, %40 : vector<16x128xf32>
    %cst_26 = arith.constant 0.000000e+00 : f32
    %42 = vector.broadcast %cst_26 : f32 to vector<16x128xf32>
    %43 = arith.maximumf %41, %42 : vector<16x128xf32>
    %44 = tpu.iota {dimensions = array<i32: 0>} : vector<16x128xi32>
    %c16_i32 = arith.constant 16 : i32
    %45 = vector.broadcast %c16_i32 : i32 to vector<16x128xi32>
    %46 = arith.cmpi slt, %44, %45 : vector<16x128xi32>
    %47 = arith.extui %46 : vector<16x128xi1> to vector<16x128xi32>
    %48 = arith.sitofp %47 : vector<16x128xi32> to vector<16x128xf32>
    %49 = arith.mulf %43, %48 : vector<16x128xf32>
    %cst_27 = arith.constant dense<0.000000e+00> : vector<128xf32>
    %50 = vector.multi_reduction <add>, %49, %cst_27 [0] : vector<16x128xf32> to vector<128xf32>
    %51 = vector.shape_cast %50 : vector<128xf32> to vector<1x128xf32>
    %cst_28 = arith.constant 6.250000e-02 : f32
    %52 = vector.broadcast %cst_28 : f32 to vector<1x128xf32>
    %53 = arith.mulf %51, %52 : vector<1x128xf32>
    %54 = vector.broadcast %53 : vector<1x128xf32> to vector<16x128xf32>
    %55 = arith.subf %43, %54 : vector<16x128xf32>
    %56 = arith.mulf %55, %48 : vector<16x128xf32>
    %57 = arith.mulf %56, %56 : vector<16x128xf32>
    %cst_29 = arith.constant dense<0.000000e+00> : vector<128xf32>
    %58 = vector.multi_reduction <add>, %57, %cst_29 [0] : vector<16x128xf32> to vector<128xf32>
    %59 = vector.shape_cast %58 : vector<128xf32> to vector<1x128xf32>
    %cst_30 = arith.constant 6.250000e-02 : f32
    %60 = vector.broadcast %cst_30 : f32 to vector<1x128xf32>
    %61 = arith.mulf %59, %60 : vector<1x128xf32>
    %cst_31 = arith.constant 9.99999974E-6 : f32
    %62 = vector.broadcast %cst_31 : f32 to vector<1x128xf32>
    %63 = arith.addf %61, %62 : vector<1x128xf32>
    %64 = math.rsqrt %63 : vector<1x128xf32>
    %65 = vector.broadcast %64 : vector<1x128xf32> to vector<16x128xf32>
    %66 = arith.mulf %56, %65 : vector<16x128xf32>
    %c0_32 = arith.constant 0 : index
    %c0_33 = arith.constant 0 : index
    %c0_34 = arith.constant 0 : index
    %67 = vector.load %arg9[%c0_32, %c0_33, %c0_34] : memref<1x1x128xf32, #tpu.memory_space<vmem>>, vector<1x1x128xf32>
    %68 = vector.shape_cast %67 : vector<1x1x128xf32> to vector<1x128xf32>
    %69 = vector.broadcast %68 : vector<1x128xf32> to vector<16x128xf32>
    %70 = arith.mulf %66, %69 : vector<16x128xf32>
    %c0_35 = arith.constant 0 : index
    %c0_36 = arith.constant 0 : index
    %c0_37 = arith.constant 0 : index
    %71 = vector.load %arg10[%c0_35, %c0_36, %c0_37] : memref<1x1x128xf32, #tpu.memory_space<vmem>>, vector<1x1x128xf32>
    %72 = vector.shape_cast %71 : vector<1x1x128xf32> to vector<1x128xf32>
    %73 = vector.broadcast %72 : vector<1x128xf32> to vector<16x128xf32>
    %74 = arith.addf %70, %73 : vector<16x128xf32>
    %c0_38 = arith.constant 0 : index
    %c0_39 = arith.constant 0 : index
    %75 = vector.load %arg12[%c0_38, %c0_39] : memref<16x128xf32, #tpu.memory_space<vmem>>, vector<16x128xf32>
    tpu.vector_store %arg12[%c0_38, %c0_39], %74 {strides = array<i32>} : memref<16x128xf32, #tpu.memory_space<vmem>>, vector<16x128xf32>,
    %c0_40 = arith.constant 0 : index
    %c0_41 = arith.constant 0 : index
    %76 = vector.load %arg4[%c0_40, %c0_41] : memref<2x16xbf16, #tpu.memory_space<vmem>>, vector<2x16xbf16>
    %77 = arith.truncf %74 : vector<16x128xf32> to vector<16x128xbf16>
    %cst_42 = arith.constant dense<0.000000e+00> : vector<2x128xf32>
    %78 = tpu.matmul %76, %77, %cst_42 {dimension_numbers = #tpu.dot_dimension_numbers<[1], [0], [0], [1], [0, 0, 1, 1], [], []>} : vector<2x16xbf16>, vector<16x128xbf16>, vector<2x128xf32> -> vector<2x128xf32>
    %c0_43 = arith.constant 0 : index
    %c0_44 = arith.constant 0 : index
    %c0_45 = arith.constant 0 : index
    %79 = vector.load %arg11[%c0_43, %c0_44, %c0_45] : memref<1x2x128xf32, #tpu.memory_space<vmem>>, vector<1x2x128xf32>
    %80 = vector.shape_cast %79 : vector<1x2x128xf32> to vector<2x128xf32>
    %81 = vector.shape_cast %78 : vector<2x128xf32> to vector<1x2x128xf32>
    tpu.vector_store %arg11[%c0_43, %c0_44, %c0_45], %81 {strides = array<i32>} : memref<1x2x128xf32, #tpu.memory_space<vmem>>, vector<1x2x128xf32>,
    return
  }
  func.func @transform_0(%arg0: i32) -> (i32, i32) {
    %c0_i32 = arith.constant 0 : i32
    %c0_i32_0 = arith.constant 0 : i32
    %c0_i32_1 = arith.constant 0 : i32
    return %c0_i32, %c0_i32_0 : i32, i32
  }
  func.func @transform_1(%arg0: i32) -> (i32, i32) {
    %c0_i32 = arith.constant 0 : i32
    %c0_i32_0 = arith.constant 0 : i32
    %c0_i32_1 = arith.constant 0 : i32
    return %c0_i32, %c0_i32_0 : i32, i32
  }
  func.func @transform_2(%arg0: i32) -> (i32, i32) {
    %c0_i32 = arith.constant 0 : i32
    %c0_i32_0 = arith.constant 0 : i32
    %c0_i32_1 = arith.constant 0 : i32
    return %c0_i32, %c0_i32_0 : i32, i32
  }
  func.func @transform_3(%arg0: i32) -> (i32, i32) {
    %c0_i32 = arith.constant 0 : i32
    %c0_i32_0 = arith.constant 0 : i32
    %c0_i32_1 = arith.constant 0 : i32
    return %c0_i32, %c0_i32_0 : i32, i32
  }
  func.func @transform_4(%arg0: i32) -> (i32, i32, i32) {
    %c0_i32 = arith.constant 0 : i32
    %c0_i32_0 = arith.constant 0 : i32
    %c0_i32_1 = arith.constant 0 : i32
    return %arg0, %c0_i32, %c0_i32_0 : i32, i32, i32
  }
  func.func @transform_5(%arg0: i32) -> (i32, i32, i32) {
    %c0_i32 = arith.constant 0 : i32
    %c0_i32_0 = arith.constant 0 : i32
    %c0_i32_1 = arith.constant 0 : i32
    return %arg0, %c0_i32, %c0_i32_0 : i32, i32, i32
  }
  func.func @transform_6(%arg0: i32) -> (i32, i32, i32) {
    %c0_i32 = arith.constant 0 : i32
    %c0_i32_0 = arith.constant 0 : i32
    %c0_i32_1 = arith.constant 0 : i32
    return %arg0, %c0_i32, %c0_i32_0 : i32, i32, i32
  }
  func.func @transform_7(%arg0: i32) -> (i32, i32, i32) {
    %c0_i32 = arith.constant 0 : i32
    %c0_i32_0 = arith.constant 0 : i32
    %c0_i32_1 = arith.constant 0 : i32
    return %arg0, %c0_i32, %c0_i32_0 : i32, i32, i32
  }
  func.func @transform_8(%arg0: i32) -> (i32, i32, i32) {
    %c0_i32 = arith.constant 0 : i32
    %c0_i32_0 = arith.constant 0 : i32
    %c0_i32_1 = arith.constant 0 : i32
    return %arg0, %c0_i32, %c0_i32_0 : i32, i32, i32
  }
  func.func @transform_9(%arg0: i32) -> (i32, i32, i32) {
    %c0_i32 = arith.constant 0 : i32
    %c0_i32_0 = arith.constant 0 : i32
    %c0_i32_1 = arith.constant 0 : i32
    return %arg0, %c0_i32, %c0_i32_0 : i32, i32, i32
  }
  func.func @transform_10(%arg0: i32) -> (i32, i32, i32) {
    %c0_i32 = arith.constant 0 : i32
    %c0_i32_0 = arith.constant 0 : i32
    %c0_i32_1 = arith.constant 0 : i32
    return %arg0, %c0_i32, %c0_i32_0 : i32, i32, i32
  }
}

</mosaic_0001>

<llo_original>
// kernel: squeeze.12
$region0: #{squeeze.12}
  %s0 = inlined_call_operand.vmem [shape: f32[1,2,3,32], index: 0, kind: input, shape index: {}]
  %s1 = inlined_call_operand.hbm [shape: f32[2,96], index: 1, kind: output, shape index: {}]
  $region1: #{squeeze.12} parent=0
    #allocation0 [shape = 'u8[1024]{0}', space=vmem, size = 0x400, scoped, tag = 'operand span for operand 1']
    #allocation1 [shape = 's32[1]{0}', space=sflag, size = 0x4, scoped, tag = 'scoped memory for squeeze.12']
    #allocation2 [shape = 'u8[4096]{0}', space=vmem, size = 0x1000, scoped, tag = 'scoped mem for output reshape']
    #allocation3 [shape = 'u8[8192]{0}', space=vmem, size = 0x2000, scoped, tag = 'scoped mem for input reshape']
    %2 = vsyncpa [#allocation1], 0
    %s4 = sshll.u32 1, 4
    %s5 = ssub.s32 %s4, 1
    %s6 = scalar_lea.vmem %s0, 4
    %v7 = vld [vmem:[%s6] sm:%s5]
    %s8 = scalar_lea.vmem [#allocation3], 8
    %9 = vst [vmem:[%s8] sm:%s5] %v7
    %v10 = vld [vmem:[%s0] sm:%s5]
    %11 = vst [vmem:[#allocation3] sm:%s5] %v10
    %s12 = smov 3
    %v13 = vld [vmem:[#allocation3] ss:$8 sm:%s12]
    %vm14 = vcmask 261120
    %15 = vst.msk [vmem:[#allocation2] sm:$0x3] %vm14, %v13
    %s16 = scalar_lea.vmem [#allocation3], 2
    %s17 = smov 3
    %v18 = vld [vmem:[%s16] ss:$8 sm:%s17]
    %19 = vrot.lane.b32.xlu0 %v18, 64
    %v20 = vpop.permute.xlu0 %19
    %vm21 = vcmask 785920
    %22 = vst.msk [vmem:[#allocation2] sm:$0x3] %vm21, %v20
    %s23 = scalar_lea.vmem [#allocation3], 1
    %s24 = smov 3
    %v25 = vld [vmem:[%s23] ss:$8 sm:%s24]
    %26 = vrot.lane.b32.xlu0 %v25, 32
    %v27 = vpop.permute.xlu0 %26
    %vm28 = vcmask 523520
    %29 = vst.msk [vmem:[#allocation2] sm:$0x3] %vm28, %v27
    %s31 = sshll.u32 1, 2
    %s32 = ssub.s32 %s31, 1
    %v34 = vld [vmem:[#allocation2] sm:%s32]
    %s35 = sshll.u32 1, 2
    %s36 = ssub.s32 %s35, 1
    %37 = vst [vmem:[#allocation0] sm:%s36] %v34
    %s39 = ssub.s32 32, 32
    %40 = vsyncadd [#allocation1], %s39
    %s42 = sshll.u32 [#allocation0], 4
    %s43 = int_to_ptr.vmem [resolvable:$true] %s42
    %45 = dma.vmem_to_hbm [thread:$0]  %s43, 32, %s1, [#allocation1]
    %46 = dma.done [#allocation1], 32
    %47 = vsyncpa [#allocation1], 1

// kernel: encoder_forward.1
$region0: #{encoder_forward.1}
  #allocation0 [shape = 'u32[]', space=smem, size = 0x4, offset = 0x4, fixed_abs, tag = 'smem constant byte address 0x4 - core index']
  #allocation1 [shape = 'u32[144,128]{1,0:T(1,128)}', space=vmem, size = 0x12000, scoped, tag = 'internal scratch']
  #allocation2 [shape = 'f32[16,128]{1,0:T(8,128)}', space=vmem, size = 0x2000, scoped, tag = 'scratch operand']
  %s0 = inlined_call_operand.vmem [shape: bf16[16,16], index: 0, kind: input, shape index: {}]
  %s1 = inlined_call_operand.vmem [shape: bf16[16,16], index: 1, kind: input, shape index: {}]
  %s2 = inlined_call_operand.vmem [shape: f32[16,128], index: 2, kind: input, shape index: {}]
  %s3 = inlined_call_operand.vmem [shape: bf16[2,16], index: 3, kind: input, shape index: {}]
  %s4 = inlined_call_operand.vmem [shape: bf16[3,128,128], index: 4, kind: input, shape index: {}]
  %s5 = inlined_call_operand.vmem [shape: bf16[3,128,128], index: 5, kind: input, shape index: {}]
  %s6 = inlined_call_operand.vmem [shape: f32[3,1,128], index: 6, kind: input, shape index: {}]
  %s7 = inlined_call_operand.vmem [shape: f32[3,1,128], index: 7, kind: input, shape index: {}]
  %s8 = inlined_call_operand.vmem [shape: f32[3,1,128], index: 8, kind: input, shape index: {}]
  %s9 = inlined_call_operand.vmem [shape: f32[3,1,128], index: 9, kind: input, shape index: {}]
  %s10 = inlined_call_operand.vmem [shape: f32[3,2,128], index: 10, kind: output, shape index: {}]
  %s11 = sld [smem:[#allocation0]]
  $region77: #{encoder_forward.1} parent=0
    _
  %s13 = ssub.s32 1, %s11
  %s14 = scalar_select 0, %s13, %s11
  loop: start=0, step=1, limit=5
  $region2: #{encoder_forward.1} parent=0 // loop_pre_header
    _
  $region3: #{encoder_forward.1} parent=0 // loop_header
    %s16 = sphi 0, %s20
    %p17 = scmp.ge.s32.totalorder %s16, 5
    %s24 = sphi 0, %s24
    %s26 = sphi 0, %s24
    %s27 = sphi 0, %s26
    %s41 = sphi 0, %s27
    %s45 = sphi 0, %s45
    %s47 = sphi 0, %s45
    %s48 = sphi 0, %s47
    %s62 = sphi 0, %s48
    %s66 = sphi 0, %s66
    %s68 = sphi 0, %s66
    %s69 = sphi 0, %s68
    %s83 = sphi 0, %s69
    %s87 = sphi 0, %s87
    %s89 = sphi 0, %s87
    %s90 = sphi 0, %s89
    %s104 = sphi 0, %s90
    %s110 = sphi 0, %s112
    %s113 = sphi 0, %s110
    %s114 = sphi 0, %s113
    %s130 = sphi 0, %s114
    %s136 = sphi 0, %s138
    %s139 = sphi 0, %s136
    %s140 = sphi 0, %s139
    %s156 = sphi 0, %s140
    %s162 = sphi 0, %s164
    %s165 = sphi 0, %s162
    %s166 = sphi 0, %s165
    %s182 = sphi 0, %s166
    %s188 = sphi 0, %s190
    %s191 = sphi 0, %s188
    %s192 = sphi 0, %s191
    %s208 = sphi 0, %s192
    %s214 = sphi 0, %s216
    %s217 = sphi 0, %s214
    %s218 = sphi 0, %s217
    %s234 = sphi 0, %s218
    %s240 = sphi 0, %s242
    %s243 = sphi 0, %s240
    %s244 = sphi 0, %s243
    %s260 = sphi 0, %s244
    %s266 = sphi 0, %s268
    %s269 = sphi 0, %s266
    %s270 = sphi 0, %s269
    %s286 = sphi 0, %s270
  $region4: #{encoder_forward.1} parent=0 // loop_header_branch
    %19 = sbr.rel (%p17) target = $region8
  $region5: #{encoder_forward.1} parent=0 // loop_body
    %s21 = ssub.s32 %s16, 1
    %s22 = ssub.s32 %s16, 2
    %s23 = sadd.s32 %s16, 1
    %s25 = sadd.s32 %s24, 1
    %p28 = scmp.eq.s32.totalorder %s16, 2
    %p29 = scmp.ne.s32.totalorder %s24, %s26
    %p30 = scmp.eq.s32.totalorder %s16, 0
    %p31 = por %p29, %p30
    %p32 = scmp.ne.s32.totalorder %s24, %s26
    %p33 = scmp.eq.s32.totalorder %s21, 2
    %p34 = por %p32, %p33
    %p35 = scmp.ne.s32.totalorder %s26, %s27
    %p36 = scmp.eq.s32.totalorder %s21, 0
    %p37 = por %p35, %p36
    %p38 = scmp.ne.s32.totalorder %s26, %s27
    %p39 = scmp.eq.s32.totalorder %s22, 2
    %p40 = por %p38, %p39
    %p42 = scmp.ne.s32.totalorder %s27, %s41
    %p43 = scmp.eq.s32.totalorder %s22, 0
    %p44 = por %p42, %p43
    %s46 = sadd.s32 %s45, 1
    %p49 = scmp.eq.s32.totalorder %s16, 2
    %p50 = scmp.ne.s32.totalorder %s45, %s47
    %p51 = scmp.eq.s32.totalorder %s16, 0
    %p52 = por %p50, %p51
    %p53 = scmp.ne.s32.totalorder %s45, %s47
    %p54 = scmp.eq.s32.totalorder %s21, 2
    %p55 = por %p53, %p54
    %p56 = scmp.ne.s32.totalorder %s47, %s48
    %p57 = scmp.eq.s32.totalorder %s21, 0
    %p58 = por %p56, %p57
    %p59 = scmp.ne.s32.totalorder %s47, %s48
    %p60 = scmp.eq.s32.totalorder %s22, 2
    %p61 = por %p59, %p60
    %p63 = scmp.ne.s32.totalorder %s48, %s62
    %p64 = scmp.eq.s32.totalorder %s22, 0
    %p65 = por %p63, %p64
    %s67 = sadd.s32 %s66, 1
    %p70 = scmp.eq.s32.totalorder %s16, 2
    %p71 = scmp.ne.s32.totalorder %s66, %s68
    %p72 = scmp.eq.s32.totalorder %s16, 0
    %p73 = por %p71, %p72
    %p74 = scmp.ne.s32.totalorder %s66, %s68
    %p75 = scmp.eq.s32.totalorder %s21, 2
    %p76 = por %p74, %p75
    %p77 = scmp.ne.s32.totalorder %s68, %s69
    %p78 = scmp.eq.s32.totalorder %s21, 0
    %p79 = por %p77, %p78
    %p80 = scmp.ne.s32.totalorder %s68, %s69
    %p81 = scmp.eq.s32.totalorder %s22, 2
    %p82 = por %p80, %p81
    %p84 = scmp.ne.s32.totalorder %s69, %s83
    %p85 = scmp.eq.s32.totalorder %s22, 0
    %p86 = por %p84, %p85
    %s88 = sadd.s32 %s87, 1
    %p91 = scmp.eq.s32.totalorder %s16, 2
    %p92 = scmp.ne.s32.totalorder %s87, %s89
    %p93 = scmp.eq.s32.totalorder %s16, 0
    %p94 = por %p92, %p93
    %p95 = scmp.ne.s32.totalorder %s87, %s89
    %p96 = scmp.eq.s32.totalorder %s21, 2
    %p97 = por %p95, %p96
    %p98 = scmp.ne.s32.totalorder %s89, %s90
    %p99 = scmp.eq.s32.totalorder %s21, 0
    %p100 = por %p98, %p99
    %p101 = scmp.ne.s32.totalorder %s89, %s90
    %p102 = scmp.eq.s32.totalorder %s22, 2
    %p103 = por %p101, %p102
    %p105 = scmp.ne.s32.totalorder %s90, %s104
    %p106 = scmp.eq.s32.totalorder %s22, 0
    %p107 = por %p105, %p106
    %s108 = ssub.s32 %s16, %s23
    %p109 = scmp.eq.s32.totalorder %s108, 0
    %s111 = sadd.s32 %s110, 1
    %s112 = scalar_select %p109, %s110, %s111
    %p115 = pneg %p109
    %p116 = scmp.eq.s32.totalorder %s16, 2
    %p117 = por %p115, %p116
    %p118 = scmp.ne.s32.totalorder %s110, %s113
    %p119 = scmp.eq.s32.totalorder %s16, 0
    %p120 = por %p118, %p119
    %p121 = scmp.ne.s32.totalorder %s110, %s113
    %p122 = scmp.eq.s32.totalorder %s21, 2
    %p123 = por %p121, %p122
    %p124 = scmp.ne.s32.totalorder %s113, %s114
    %p125 = scmp.eq.s32.totalorder %s21, 0
    %p126 = por %p124, %p125
    %p127 = scmp.ne.s32.totalorder %s113, %s114
    %p128 = scmp.eq.s32.totalorder %s22, 2
    %p129 = por %p127, %p128
    %p131 = scmp.ne.s32.totalorder %s114, %s130
    %p132 = scmp.eq.s32.totalorder %s22, 0
    %p133 = por %p131, %p132
    %s134 = ssub.s32 %s16, %s23
    %p135 = scmp.eq.s32.totalorder %s134, 0
    %s137 = sadd.s32 %s136, 1
    %s138 = scalar_select %p135, %s136, %s137
    %p141 = pneg %p135
    %p142 = scmp.eq.s32.totalorder %s16, 2
    %p143 = por %p141, %p142
    %p144 = scmp.ne.s32.totalorder %s136, %s139
    %p145 = scmp.eq.s32.totalorder %s16, 0
    %p146 = por %p144, %p145
    %p147 = scmp.ne.s32.totalorder %s136, %s139
    %p148 = scmp.eq.s32.totalorder %s21, 2
    %p149 = por %p147, %p148
    %p150 = scmp.ne.s32.totalorder %s139, %s140
    %p151 = scmp.eq.s32.totalorder %s21, 0
    %p152 = por %p150, %p151
    %p153 = scmp.ne.s32.totalorder %s139, %s140
    %p154 = scmp.eq.s32.totalorder %s22, 2
    %p155 = por %p153, %p154
    %p157 = scmp.ne.s32.totalorder %s140, %s156
    %p158 = scmp.eq.s32.totalorder %s22, 0
    %p159 = por %p157, %p158
    %s160 = ssub.s32 %s16, %s23
    %p161 = scmp.eq.s32.totalorder %s160, 0
    %s163 = sadd.s32 %s162, 1
    %s164 = scalar_select %p161, %s162, %s163
    %p167 = pneg %p161
    %p168 = scmp.eq.s32.totalorder %s16, 2
    %p169 = por %p167, %p168
    %p170 = scmp.ne.s32.totalorder %s162, %s165
    %p171 = scmp.eq.s32.totalorder %s16, 0
    %p172 = por %p170, %p171
    %p173 = scmp.ne.s32.totalorder %s162, %s165
    %p174 = scmp.eq.s32.totalorder %s21, 2
    %p175 = por %p173, %p174
    %p176 = scmp.ne.s32.totalorder %s165, %s166
    %p177 = scmp.eq.s32.totalorder %s21, 0
    %p178 = por %p176, %p177
    %p179 = scmp.ne.s32.totalorder %s165, %s166
    %p180 = scmp.eq.s32.totalorder %s22, 2
    %p181 = por %p179, %p180
    %p183 = scmp.ne.s32.totalorder %s166, %s182
    %p184 = scmp.eq.s32.totalorder %s22, 0
    %p185 = por %p183, %p184
    %s186 = ssub.s32 %s16, %s23
    %p187 = scmp.eq.s32.totalorder %s186, 0
    %s189 = sadd.s32 %s188, 1
    %s190 = scalar_select %p187, %s188, %s189
    %p193 = pneg %p187
    %p194 = scmp.eq.s32.totalorder %s16, 2
    %p195 = por %p193, %p194
    %p196 = scmp.ne.s32.totalorder %s188, %s191
    %p197 = scmp.eq.s32.totalorder %s16, 0
    %p198 = por %p196, %p197
    %p199 = scmp.ne.s32.totalorder %s188, %s191
    %p200 = scmp.eq.s32.totalorder %s21, 2
    %p201 = por %p199, %p200
    %p202 = scmp.ne.s32.totalorder %s191, %s192
    %p203 = scmp.eq.s32.totalorder %s21, 0
    %p204 = por %p202, %p203
    %p205 = scmp.ne.s32.totalorder %s191, %s192
    %p206 = scmp.eq.s32.totalorder %s22, 2
    %p207 = por %p205, %p206
    %p209 = scmp.ne.s32.totalorder %s192, %s208
    %p210 = scmp.eq.s32.totalorder %s22, 0
    %p211 = por %p209, %p210
    %s212 = ssub.s32 %s16, %s23
    %p213 = scmp.eq.s32.totalorder %s212, 0
    %s215 = sadd.s32 %s214, 1
    %s216 = scalar_select %p213, %s214, %s215
    %p219 = pneg %p213
    %p220 = scmp.eq.s32.totalorder %s16, 2
    %p221 = por %p219, %p220
    %p222 = scmp.ne.s32.totalorder %s214, %s217
    %p223 = scmp.eq.s32.totalorder %s16, 0
    %p224 = por %p222, %p223
    %p225 = scmp.ne.s32.totalorder %s214, %s217
    %p226 = scmp.eq.s32.totalorder %s21, 2
    %p227 = por %p225, %p226
    %p228 = scmp.ne.s32.totalorder %s217, %s218
    %p229 = scmp.eq.s32.totalorder %s21, 0
    %p230 = por %p228, %p229
    %p231 = scmp.ne.s32.totalorder %s217, %s218
    %p232 = scmp.eq.s32.totalorder %s22, 2
    %p233 = por %p231, %p232
    %p235 = scmp.ne.s32.totalorder %s218, %s234
    %p236 = scmp.eq.s32.totalorder %s22, 0
    %p237 = por %p235, %p236
    %s238 = ssub.s32 %s16, %s23
    %p239 = scmp.eq.s32.totalorder %s238, 0
    %s241 = sadd.s32 %s240, 1
    %s242 = scalar_select %p239, %s240, %s241
    %p245 = pneg %p239
    %p246 = scmp.eq.s32.totalorder %s16, 2
    %p247 = por %p245, %p246
    %p248 = scmp.ne.s32.totalorder %s240, %s243
    %p249 = scmp.eq.s32.totalorder %s16, 0
    %p250 = por %p248, %p249
    %p251 = scmp.ne.s32.totalorder %s240, %s243
    %p252 = scmp.eq.s32.totalorder %s21, 2
    %p253 = por %p251, %p252
    %p254 = scmp.ne.s32.totalorder %s243, %s244
    %p255 = scmp.eq.s32.totalorder %s21, 0
    %p256 = por %p254, %p255
    %p257 = scmp.ne.s32.totalorder %s243, %s244
    %p258 = scmp.eq.s32.totalorder %s22, 2
    %p259 = por %p257, %p258
    %p261 = scmp.ne.s32.totalorder %s244, %s260
    %p262 = scmp.eq.s32.totalorder %s22, 0
    %p263 = por %p261, %p262
    %s264 = ssub.s32 %s16, %s23
    %p265 = scmp.eq.s32.totalorder %s264, 0
    %s267 = sadd.s32 %s266, 1
    %s268 = scalar_select %p265, %s266, %s267
    %p271 = pneg %p265
    %p272 = scmp.eq.s32.totalorder %s16, 2
    %p273 = por %p271, %p272
    %p274 = scmp.ne.s32.totalorder %s266, %s269
    %p275 = scmp.eq.s32.totalorder %s16, 0
    %p276 = por %p274, %p275
    %p277 = scmp.ne.s32.totalorder %s266, %s269
    %p278 = scmp.eq.s32.totalorder %s21, 2
    %p279 = por %p277, %p278
    %p280 = scmp.ne.s32.totalorder %s269, %s270
    %p281 = scmp.eq.s32.totalorder %s21, 0
    %p282 = por %p280, %p281
    %p283 = scmp.ne.s32.totalorder %s269, %s270
    %p284 = scmp.eq.s32.totalorder %s22, 2
    %p285 = por %p283, %p284
    %p287 = scmp.ne.s32.totalorder %s270, %s286
    %p288 = scmp.eq.s32.totalorder %s22, 0
    %p289 = por %p287, %p288
    %p290 = scmp.le.s32.totalorder 1, %s16
    %p291 = scmp.lt.s32.totalorder %s16, 4
    %p292 = pnand %p290, %p291
    %p293 = pneg %p292
    // Predicated region
    $region9: #{encoder_forward.1} parent=5 // pred_check
      _
    $region10: #{encoder_forward.1} parent=5 // pred_check_branch
      %295 = sbr.rel (%p292) target = $region12
    $region11: #{encoder_forward.1} parent=5 // pred_region
      %s296 = ssub.s32 %s16, 1
      // Predicated region
      $region13: #{encoder_forward.1} parent=11 // pred_check
        %p297 = pneg %p37
      $region14: #{encoder_forward.1} parent=11 // pred_check_branch
        %299 = sbr.rel (%p297) target = $region16
      $region15: #{encoder_forward.1} parent=11 // pred_region
        _
      $region16: #{encoder_forward.1} parent=11 // pred_fallthru
        _
      // Predicated region
      $region17: #{encoder_forward.1} parent=11 // pred_check
        %p300 = pneg %p58
      $region18: #{encoder_forward.1} parent=11 // pred_check_branch
        %302 = sbr.rel (%p300) target = $region20
      $region19: #{encoder_forward.1} parent=11 // pred_region
        _
      $region20: #{encoder_forward.1} parent=11 // pred_fallthru
        _
      // Predicated region
      $region21: #{encoder_forward.1} parent=11 // pred_check
        %p303 = pneg %p79
      $region22: #{encoder_forward.1} parent=11 // pred_check_branch
        %305 = sbr.rel (%p303) target = $region24
      $region23: #{encoder_forward.1} parent=11 // pred_region
        _
      $region24: #{encoder_forward.1} parent=11 // pred_fallthru
        _
      // Predicated region
      $region25: #{encoder_forward.1} parent=11 // pred_check
        %p306 = pneg %p100
      $region26: #{encoder_forward.1} parent=11 // pred_check_branch
        %308 = sbr.rel (%p306) target = $region28
      $region27: #{encoder_forward.1} parent=11 // pred_region
        _
      $region28: #{encoder_forward.1} parent=11 // pred_fallthru
        _
    $region12: #{encoder_forward.1} parent=5 // pred_fallthru
      _
    %p309 = scmp.lt.s32.totalorder %s16, 3
    // Predicated region
    $region29: #{encoder_forward.1} parent=5 // pred_check
      %p310 = pneg %p309
    $region30: #{encoder_forward.1} parent=5 // pred_check_branch
      %312 = sbr.rel (%p310) target = $region32
    $region31: #{encoder_forward.1} parent=5 // pred_region
      // Predicated region
      $region33: #{encoder_forward.1} parent=31 // pred_check
        %p313 = pneg %p120
      $region34: #{encoder_forward.1} parent=31 // pred_check_branch
        %315 = sbr.rel (%p313) target = $region36
      $region35: #{encoder_forward.1} parent=31 // pred_region
        %p316 = scmp.lt.s32.totalorder %s16, 2
        %s317 = scalar_select %p316, %s16, 2
        %s318 = smul.addr %s317, 16
        %s319 = smul.addr %s318, 4
        %s320 = scalar_lea.vmem %s4, %s319
      $region36: #{encoder_forward.1} parent=31 // pred_fallthru
        _
      // Predicated region
      $region37: #{encoder_forward.1} parent=31 // pred_check
        %p321 = pneg %p146
      $region38: #{encoder_forward.1} parent=31 // pred_check_branch
        %323 = sbr.rel (%p321) target = $region40
      $region39: #{encoder_forward.1} parent=31 // pred_region
        %p324 = scmp.lt.s32.totalorder %s16, 2
        %s325 = scalar_select %p324, %s16, 2
        %s326 = smul.addr %s325, 16
        %s327 = smul.addr %s326, 4
        %s328 = scalar_lea.vmem %s5, %s327
      $region40: #{encoder_forward.1} parent=31 // pred_fallthru
        _
      // Predicated region
      $region41: #{encoder_forward.1} parent=31 // pred_check
        %p329 = pneg %p172
      $region42: #{encoder_forward.1} parent=31 // pred_check_branch
        %331 = sbr.rel (%p329) target = $region44
      $region43: #{encoder_forward.1} parent=31 // pred_region
        %p332 = scmp.lt.s32.totalorder %s16, 2
        %s333 = scalar_select %p332, %s16, 2
        %s334 = scalar_lea.vmem %s6, %s333
      $region44: #{encoder_forward.1} parent=31 // pred_fallthru
        _
      // Predicated region
      $region45: #{encoder_forward.1} parent=31 // pred_check
        %p335 = pneg %p198
      $region46: #{encoder_forward.1} parent=31 // pred_check_branch
        %337 = sbr.rel (%p335) target = $region48
      $region47: #{encoder_forward.1} parent=31 // pred_region
        %p338 = scmp.lt.s32.totalorder %s16, 2
        %s339 = scalar_select %p338, %s16, 2
        %s340 = scalar_lea.vmem %s7, %s339
      $region48: #{encoder_forward.1} parent=31 // pred_fallthru
        _
      // Predicated region
      $region49: #{encoder_forward.1} parent=31 // pred_check
        %p341 = pneg %p224
      $region50: #{encoder_forward.1} parent=31 // pred_check_branch
        %343 = sbr.rel (%p341) target = $region52
      $region51: #{encoder_forward.1} parent=31 // pred_region
        %p344 = scmp.lt.s32.totalorder %s16, 2
        %s345 = scalar_select %p344, %s16, 2
        %s346 = scalar_lea.vmem %s8, %s345
      $region52: #{encoder_forward.1} parent=31 // pred_fallthru
        _
      // Predicated region
      $region53: #{encoder_forward.1} parent=31 // pred_check
        %p347 = pneg %p250
      $region54: #{encoder_forward.1} parent=31 // pred_check_branch
        %349 = sbr.rel (%p347) target = $region56
      $region55: #{encoder_forward.1} parent=31 // pred_region
        %p350 = scmp.lt.s32.totalorder %s16, 2
        %s351 = scalar_select %p350, %s16, 2
        %s352 = scalar_lea.vmem %s9, %s351
      $region56: #{encoder_forward.1} parent=31 // pred_fallthru
        _
    $region32: #{encoder_forward.1} parent=5 // pred_fallthru
      _
    %p353 = scmp.le.s32.totalorder 1, %s16
    %p354 = scmp.lt.s32.totalorder %s16, 4
    %p355 = pnand %p353, %p354
    %p356 = pneg %p355
    // Predicated region
    $region57: #{encoder_forward.1} parent=5 // pred_check
      _
    $region58: #{encoder_forward.1} parent=5 // pred_check_branch
      %358 = sbr.rel (%p355) target = $region60
    $region59: #{encoder_forward.1} parent=5 // pred_region
      %s359 = ssub.s32 %s16, 1
      %p360 = pneg %p37
      %p361 = pneg %p34
      %p362 = pneg %p58
      %p363 = pneg %p55
      %p364 = pneg %p79
      %p365 = pneg %p76
      %p366 = pneg %p100
      %p367 = pneg %p97
      %p368 = scmp.lt.s32.totalorder %s21, 2
      %s369 = scalar_select %p368, %s21, 2
      %s370 = smul.addr %s369, 16
      %s371 = smul.addr %s370, 4
      %s372 = scalar_lea.vmem %s4, %s371
      %p373 = pneg %p126
      %p374 = pneg %p123
      %p375 = scmp.lt.s32.totalorder %s21, 2
      %s376 = scalar_select %p375, %s21, 2
      %s377 = smul.addr %s376, 16
      %s378 = smul.addr %s377, 4
      %s379 = scalar_lea.vmem %s5, %s378
      %p380 = pneg %p152
      %p381 = pneg %p149
      %p382 = scmp.lt.s32.totalorder %s21, 2
      %s383 = scalar_select %p382, %s21, 2
      %s384 = scalar_lea.vmem %s6, %s383
      %p385 = pneg %p178
      %p386 = pneg %p175
      %p387 = scmp.lt.s32.totalorder %s21, 2
      %s388 = scalar_select %p387, %s21, 2
      %s389 = scalar_lea.vmem %s7, %s388
      %p390 = pneg %p204
      %p391 = pneg %p201
      %p392 = scmp.lt.s32.totalorder %s21, 2
      %s393 = scalar_select %p392, %s21, 2
      %s394 = scalar_lea.vmem %s8, %s393
      %p395 = pneg %p230
      %p396 = pneg %p227
      %p397 = scmp.lt.s32.totalorder %s21, 2
      %s398 = scalar_select %p397, %s21, 2
      %s399 = scalar_lea.vmem %s9, %s398
      %p400 = pneg %p256
      %p401 = pneg %p253
      %p402 = pneg %p282
      %p403 = pneg %p279
      %p404 = scmp.lt.s32.totalorder %s21, 2
      %s405 = scalar_select %p404, %s21, 2
      %s406 = smul.addr %s405, 2
      %s407 = scalar_lea.vmem %s10, %s406
      %p408 = scmp.lt.s32.totalorder %s21, 2
      %s409 = scalar_select %p408, %s21, 2
      %s410 = smul.addr %s409, 16
      %s411 = smul.addr %s410, 4
      %s412 = scalar_lea.vmem %s4, %s411
      %p413 = scmp.lt.s32.totalorder %s21, 2
      %s414 = scalar_select %p413, %s21, 2
      %s415 = smul.addr %s414, 16
      %s416 = smul.addr %s415, 4
      %s417 = scalar_lea.vmem %s5, %s416
      %p418 = scmp.lt.s32.totalorder %s21, 2
      %s419 = scalar_select %p418, %s21, 2
      %s420 = scalar_lea.vmem %s6, %s419
      %p421 = scmp.lt.s32.totalorder %s21, 2
      %s422 = scalar_select %p421, %s21, 2
      %s423 = scalar_lea.vmem %s7, %s422
      %p424 = scmp.lt.s32.totalorder %s21, 2
      %s425 = scalar_select %p424, %s21, 2
      %s426 = scalar_lea.vmem %s8, %s425
      %p427 = scmp.lt.s32.totalorder %s21, 2
      %s428 = scalar_select %p427, %s21, 2
      %s429 = scalar_lea.vmem %s9, %s428
      %p430 = scmp.lt.s32.totalorder %s21, 2
      %s431 = scalar_select %p430, %s21, 2
      %s432 = smul.addr %s431, 2
      %s433 = scalar_lea.vmem %s10, %s432
      %p435 = scmp.eq.s32.totalorder %s21, 0
      // Predicated region
      $region61: #{encoder_forward.1} parent=59 // pred_check
        %p436 = pneg %p435
      $region62: #{encoder_forward.1} parent=59 // pred_check_branch
        %438 = sbr.rel (%p436) target = $region64
      $region63: #{encoder_forward.1} parent=59 // pred_region
        %v439 = vld [vmem:[%s2] sm:$0xff]
        %v440 = vld [vmem:[%s2 + $0x8] sm:$0xff]
        %441 = vst [vmem:[#allocation2] sm:$0xff] %v439
        %442 = vst [vmem:[#allocation2 + $0x8] sm:$0xff] %v440
      $region64: #{encoder_forward.1} parent=59 // pred_fallthru
        _
      %v443 = vld [vmem:[#allocation2] sm:$0xff]
      %v444 = vld [vmem:[#allocation2 + $0x8] sm:$0xff]
      %v445 = vpack.c.bf16 %v444, %v443
      %v446 = vld [vmem:[%s0] sm:$0xf]
      %v447 = vld [vmem:[%s0 + $0x4] sm:$0xf]
      %v450 = vunpack.c.l.b16 %v446
      %v451 = vunpack.c.l.b16 %v447
      %v452 = vpack.c.b16 %v451, %v450
      %vm453 = vcmask 130048
      %v455 = vsel %vm453, %v452, 0
      %457 = vmatprep.subr.bf16.mxu0 0
      %458 = vmatpush1.bf16.msra.mxu0 0
      %459 = vmatprep.subr.bf16.mxu0 0
      %460 = vmatpush1.bf16.msra.mxu0 0
      %461 = vmatprep.subr.bf16.mxu0 0
      %462 = vmatpush1.bf16.msra.mxu0 0
      %463 = vmatprep.subr.bf16.mxu0 0
      %464 = vmatpush1.bf16.msra.mxu0 0
      %465 = vmatprep.subr.bf16.mxu0 0
      %466 = vmatpush1.bf16.msra.mxu0 0
      %467 = vmatprep.subr.bf16.mxu0 0
      %468 = vmatpush1.bf16.msra.mxu0 0
      %469 = vmatprep.subr.bf16.mxu0 0
      %470 = vmatpush1.bf16.msra.mxu0 0
      %471 = vmatprep.subr.bf16.mxu0 0
      %472 = vmatpush1.bf16.msra.mxu0 %v445
      %473 = vmatprep.subr.bf16.mxu0 0
      %474 = vmatpush2.bf16.msra.mxu0 0
      %475 = vmatprep.subr.bf16.mxu0 0
      %476 = vmatpush2.bf16.msra.mxu0 0
      %477 = vmatprep.subr.bf16.mxu0 0
      %478 = vmatpush2.bf16.msra.mxu0 0
      %479 = vmatprep.subr.bf16.mxu0 0
      %480 = vmatpush2.bf16.msra.mxu0 0
      %481 = vmatprep.subr.bf16.mxu0 0
      %482 = vmatpush2.bf16.msra.mxu0 0
      %483 = vmatprep.subr.bf16.mxu0 0
      %484 = vmatpush2.bf16.msra.mxu0 0
      %485 = vmatprep.subr.bf16.mxu0 0
      %486 = vmatpush2.bf16.msra.mxu0 0
      %487 = vmatprep.subr.bf16.mxu0 0
      %488 = vmatpush2.bf16.msra.mxu0 0
      %489 = vmatprep.mubr.bf16.mxu0 0
      %490 = vmatmul.mubr.bf16.gmra.mxu0 %v455
      %v491 = vpop.f32.mrf.mxu0
      %v492 = vadd.f32 0.0, %v491
      %v493 = vpop.f32.mrf.mxu0
      %v494 = vpop.f32.mrf.mxu0
      %v495 = vadd.f32 0.0, %v494
      %v496 = vpop.f32.mrf.mxu0
      %497 = vdwg.mxu0
      %v498 = vld [vmem:[%s1] sm:$0xf]
      %v499 = vld [vmem:[%s1 + $0x4] sm:$0xf]
      %v502 = vunpack.c.l.b16 %v498
      %v503 = vunpack.c.l.b16 %v499
      %v504 = vpack.c.b16 %v503, %v502
      %v506 = vsel %vm453, %v504, 0
      %508 = vmatprep.subr.bf16.mxu0 0
      %509 = vmatpush1.bf16.msra.mxu0 0
      %510 = vmatprep.subr.bf16.mxu0 0
      %511 = vmatpush1.bf16.msra.mxu0 0
      %512 = vmatprep.subr.bf16.mxu0 0
      %513 = vmatpush1.bf16.msra.mxu0 0
      %514 = vmatprep.subr.bf16.mxu0 0
      %515 = vmatpush1.bf16.msra.mxu0 0
      %516 = vmatprep.subr.bf16.mxu0 0
      %517 = vmatpush1.bf16.msra.mxu0 0
      %518 = vmatprep.subr.bf16.mxu0 0
      %519 = vmatpush1.bf16.msra.mxu0 0
      %520 = vmatprep.subr.bf16.mxu0 0
      %521 = vmatpush1.bf16.msra.mxu0 0
      %522 = vmatprep.subr.bf16.mxu0 0
      %523 = vmatpush1.bf16.msra.mxu0 %v445
      %524 = vmatprep.subr.bf16.mxu0 0
      %525 = vmatpush2.bf16.msra.mxu0 0
      %526 = vmatprep.subr.bf16.mxu0 0
      %527 = vmatpush2.bf16.msra.mxu0 0
      %528 = vmatprep.subr.bf16.mxu0 0
      %529 = vmatpush2.bf16.msra.mxu0 0
      %530 = vmatprep.subr.bf16.mxu0 0
      %531 = vmatpush2.bf16.msra.mxu0 0
      %532 = vmatprep.subr.bf16.mxu0 0
      %533 = vmatpush2.bf16.msra.mxu0 0
      %534 = vmatprep.subr.bf16.mxu0 0
      %535 = vmatpush2.bf16.msra.mxu0 0
      %536 = vmatprep.subr.bf16.mxu0 0
      %537 = vmatpush2.bf16.msra.mxu0 0
      %538 = vmatprep.subr.bf16.mxu0 0
      %539 = vmatpush2.bf16.msra.mxu0 0
      %540 = vmatprep.mubr.bf16.mxu0 0
      %541 = vmatmul.mubr.bf16.gmra.mxu0 %v506
      %v542 = vpop.f32.mrf.mxu0
      %v543 = vadd.f32 0.0, %v542
      %v544 = vpop.f32.mrf.mxu0
      %v545 = vpop.f32.mrf.mxu0
      %v546 = vadd.f32 0.0, %v545
      %v547 = vpop.f32.mrf.mxu0
      %548 = vdwg.mxu0
      %v549 = vlaneseq
      %v550 = vand.u32 %v549, 127
      %vm551 = vcmp.lt.s32.totalorder %v550, 32
      %vm552 = vcmp.lt.s32.totalorder %v550, 64
      %v553 = vsel %vm552, %v543, 0.0
      %v554 = vsel %vm552, %v546, 0.0
      %v555 = vsel %vm551, %v492, %v553
      %v556 = vsel %vm551, %v495, %v554
      %v557 = vsel %vm552, 1.0, 2.0
      %v558 = vmul.f32 %v443, %v557
      %v559 = vmul.f32 %v444, %v557
      %v560 = vadd.f32 %v558, %v555
      %v561 = vadd.f32 %v559, %v556
      %v562 = vpack.c.bf16 %v561, %v560
      %v563 = vld [vmem:[%s412] sm:$0xf]
      %v564 = vld [vmem:[%s412 + $0x4] sm:$0xf]
      %v565 = vld [vmem:[%s412 + $0x8] sm:$0xf]
      %v566 = vld [vmem:[%s412 + $0xc] sm:$0xf]
      %v567 = vld [vmem:[%s412 + $0x10] sm:$0xf]
      %v568 = vld [vmem:[%s412 + $0x14] sm:$0xf]
      %v569 = vld [vmem:[%s412 + $0x18] sm:$0xf]
      %v570 = vld [vmem:[%s412 + $0x1c] sm:$0xf]
      %v571 = vld [vmem:[%s412 + $0x20] sm:$0xf]
      %v572 = vld [vmem:[%s412 + $0x24] sm:$0xf]
      %v573 = vld [vmem:[%s412 + $0x28] sm:$0xf]
      %v574 = vld [vmem:[%s412 + $0x2c] sm:$0xf]
      %v575 = vld [vmem:[%s412 + $0x30] sm:$0xf]
      %v576 = vld [vmem:[%s412 + $0x34] sm:$0xf]
      %v577 = vld [vmem:[%s412 + $0x38] sm:$0xf]
      %v578 = vld [vmem:[%s412 + $0x3c] sm:$0xf]
      %v579 = vld [vmem:[%s420] sm:$0x1]
      %v581 = vlaneseq
      %v582 = vshrl.u32 %v581, 7
      %v583 = vsub.s32 0, %v582
      %v584 = vrot.slane %v579, %v583
      %v602 = vunpack.c.l.b16 %v563
      %v603 = vunpack.c.l.b16 %v564
      %v604 = vunpack.c.l.b16 %v565
      %v605 = vunpack.c.l.b16 %v566
      %v606 = vunpack.c.l.b16 %v567
      %v607 = vunpack.c.l.b16 %v568
      %v608 = vunpack.c.l.b16 %v569
      %v609 = vunpack.c.l.b16 %v570
      %v610 = vunpack.c.l.b16 %v571
      %v611 = vunpack.c.l.b16 %v572
      %v612 = vunpack.c.l.b16 %v573
      %v613 = vunpack.c.l.b16 %v574
      %v614 = vunpack.c.l.b16 %v575
      %v615 = vunpack.c.l.b16 %v576
      %v616 = vunpack.c.l.b16 %v577
      %v617 = vunpack.c.l.b16 %v578
      %v618 = vpack.c.b16 %v603, %v602
      %v619 = vpack.c.b16 %v605, %v604
      %v620 = vpack.c.b16 %v607, %v606
      %v621 = vpack.c.b16 %v609, %v608
      %v622 = vpack.c.b16 %v611, %v610
      %v623 = vpack.c.b16 %v613, %v612
      %v624 = vpack.c.b16 %v615, %v614
      %v625 = vpack.c.b16 %v617, %v616
      %634 = vmatprep.subr.bf16.mxu0 0
      %635 = vmatpush1.bf16.msra.mxu0 %v625
      %636 = vmatprep.subr.bf16.mxu0 0
      %637 = vmatpush1.bf16.msra.mxu0 %v624
      %638 = vmatprep.subr.bf16.mxu0 0
      %639 = vmatpush1.bf16.msra.mxu0 %v623
      %640 = vmatprep.subr.bf16.mxu0 0
      %641 = vmatpush1.bf16.msra.mxu0 %v622
      %642 = vmatprep.subr.bf16.mxu0 0
      %643 = vmatpush1.bf16.msra.mxu0 %v621
      %644 = vmatprep.subr.bf16.mxu0 0
      %645 = vmatpush1.bf16.msra.mxu0 %v620
      %646 = vmatprep.subr.bf16.mxu0 0
      %647 = vmatpush1.bf16.msra.mxu0 %v619
      %648 = vmatprep.subr.bf16.mxu0 0
      %649 = vmatpush1.bf16.msra.mxu0 %v618
      %650 = vmatprep.subr.bf16.mxu0 0
      %651 = vmatpush2.bf16.msra.mxu0 0
      %652 = vmatprep.subr.bf16.mxu0 0
      %653 = vmatpush2.bf16.msra.mxu0 0
      %654 = vmatprep.subr.bf16.mxu0 0
      %655 = vmatpush2.bf16.msra.mxu0 0
      %656 = vmatprep.subr.bf16.mxu0 0
      %657 = vmatpush2.bf16.msra.mxu0 0
      %658 = vmatprep.subr.bf16.mxu0 0
      %659 = vmatpush2.bf16.msra.mxu0 0
      %660 = vmatprep.subr.bf16.mxu0 0
      %661 = vmatpush2.bf16.msra.mxu0 0
      %662 = vmatprep.subr.bf16.mxu0 0
      %663 = vmatpush2.bf16.msra.mxu0 0
      %664 = vmatprep.subr.bf16.mxu0 0
      %665 = vmatpush2.bf16.msra.mxu0 0
      %666 = vmatprep.mubr.bf16.mxu0 0
      %667 = vmatmul.mubr.bf16.gmra.mxu0 %v562
      %v668 = vpop.f32.mrf.mxu0
      %v669 = vadd.f32 %v584, %v668
      %v670 = vpop.f32.mrf.mxu0
      %v671 = vpop.f32.mrf.mxu0
      %v672 = vadd.f32 %v584, %v671
      %v673 = vpop.f32.mrf.mxu0
      %674 = vdwg.mxu0
      %v675 = vmax.f32 %v669, 0.0
      %v676 = vmax.f32 %v672, 0.0
      %v677 = vpack.c.bf16 %v676, %v675
      %v678 = vld [vmem:[%s417] sm:$0xf]
      %v679 = vld [vmem:[%s417 + $0x4] sm:$0xf]
      %v680 = vld [vmem:[%s417 + $0x8] sm:$0xf]
      %v681 = vld [vmem:[%s417 + $0xc] sm:$0xf]
      %v682 = vld [vmem:[%s417 + $0x10] sm:$0xf]
      %v683 = vld [vmem:[%s417 + $0x14] sm:$0xf]
      %v684 = vld [vmem:[%s417 + $0x18] sm:$0xf]
      %v685 = vld [vmem:[%s417 + $0x1c] sm:$0xf]
      %v686 = vld [vmem:[%s417 + $0x20] sm:$0xf]
      %v687 = vld [vmem:[%s417 + $0x24] sm:$0xf]
      %v688 = vld [vmem:[%s417 + $0x28] sm:$0xf]
      %v689 = vld [vmem:[%s417 + $0x2c] sm:$0xf]
      %v690 = vld [vmem:[%s417 + $0x30] sm:$0xf]
      %v691 = vld [vmem:[%s417 + $0x34] sm:$0xf]
      %v692 = vld [vmem:[%s417 + $0x38] sm:$0xf]
      %v693 = vld [vmem:[%s417 + $0x3c] sm:$0xf]
      %v694 = vld [vmem:[%s423] sm:$0x1]
      %v696 = vlaneseq
      %v697 = vshrl.u32 %v696, 7
      %v698 = vsub.s32 0, %v697
      %v699 = vrot.slane %v694, %v698
      %v717 = vunpack.c.l.b16 %v678
      %v718 = vunpack.c.l.b16 %v679
      %v719 = vunpack.c.l.b16 %v680
      %v720 = vunpack.c.l.b16 %v681
      %v721 = vunpack.c.l.b16 %v682
      %v722 = vunpack.c.l.b16 %v683
      %v723 = vunpack.c.l.b16 %v684
      %v724 = vunpack.c.l.b16 %v685
      %v725 = vunpack.c.l.b16 %v686
      %v726 = vunpack.c.l.b16 %v687
      %v727 = vunpack.c.l.b16 %v688
      %v728 = vunpack.c.l.b16 %v689
      %v729 = vunpack.c.l.b16 %v690
      %v730 = vunpack.c.l.b16 %v691
      %v731 = vunpack.c.l.b16 %v692
      %v732 = vunpack.c.l.b16 %v693
      %v733 = vpack.c.b16 %v718, %v717
      %v734 = vpack.c.b16 %v720, %v719
      %v735 = vpack.c.b16 %v722, %v721
      %v736 = vpack.c.b16 %v724, %v723
      %v737 = vpack.c.b16 %v726, %v725
      %v738 = vpack.c.b16 %v728, %v727
      %v739 = vpack.c.b16 %v730, %v729
      %v740 = vpack.c.b16 %v732, %v731
      %749 = vmatprep.subr.bf16.mxu0 0
      %750 = vmatpush1.bf16.msra.mxu0 %v740
      %751 = vmatprep.subr.bf16.mxu0 0
      %752 = vmatpush1.bf16.msra.mxu0 %v739
      %753 = vmatprep.subr.bf16.mxu0 0
      %754 = vmatpush1.bf16.msra.mxu0 %v738
      %755 = vmatprep.subr.bf16.mxu0 0
      %756 = vmatpush1.bf16.msra.mxu0 %v737
      %757 = vmatprep.subr.bf16.mxu0 0
      %758 = vmatpush1.bf16.msra.mxu0 %v736
      %759 = vmatprep.subr.bf16.mxu0 0
      %760 = vmatpush1.bf16.msra.mxu0 %v735
      %761 = vmatprep.subr.bf16.mxu0 0
      %762 = vmatpush1.bf16.msra.mxu0 %v734
      %763 = vmatprep.subr.bf16.mxu0 0
      %764 = vmatpush1.bf16.msra.mxu0 %v733
      %765 = vmatprep.subr.bf16.mxu0 0
      %766 = vmatpush2.bf16.msra.mxu0 0
      %767 = vmatprep.subr.bf16.mxu0 0
      %768 = vmatpush2.bf16.msra.mxu0 0
      %769 = vmatprep.subr.bf16.mxu0 0
      %770 = vmatpush2.bf16.msra.mxu0 0
      %771 = vmatprep.subr.bf16.mxu0 0
      %772 = vmatpush2.bf16.msra.mxu0 0
      %773 = vmatprep.subr.bf16.mxu0 0
      %774 = vmatpush2.bf16.msra.mxu0 0
      %775 = vmatprep.subr.bf16.mxu0 0
      %776 = vmatpush2.bf16.msra.mxu0 0
      %777 = vmatprep.subr.bf16.mxu0 0
      %778 = vmatpush2.bf16.msra.mxu0 0
      %779 = vmatprep.subr.bf16.mxu0 0
      %780 = vmatpush2.bf16.msra.mxu0 0
      %781 = vmatprep.mubr.bf16.mxu0 0
      %782 = vmatmul.mubr.bf16.gmra.mxu0 %v677
      %v783 = vpop.f32.mrf.mxu0
      %v784 = vadd.f32 %v699, %v783
      %v785 = vpop.f32.mrf.mxu0
      %v786 = vpop.f32.mrf.mxu0
      %v787 = vadd.f32 %v699, %v786
      %v788 = vpop.f32.mrf.mxu0
      %789 = vdwg.mxu0
      %v790 = vmax.f32 %v784, 0.0
      %v791 = vmax.f32 %v787, 0.0
      %v792 = vlaneseq
      %v793 = vshrl.u32 %v792, 7
      %v794 = vadd.s32 %v793, 8
      %vm795 = vcmp.lt.s32.totalorder %v793, 16
      %vm796 = vcmp.lt.s32.totalorder %v794, 16
      %v797 = vsel %vm795, 1, 0
      %v798 = vsel %vm796, 1, 0
      %v799 = vcvt.s32.f32 %v797
      %v800 = vcvt.s32.f32 %v798
      %v801 = vmul.f32 %v790, %v799
      %v802 = vmul.f32 %v791, %v800
      %v803 = vadd.f32 %v801, %v802
      %v804 = vrot.slane %v803, 4
      %v805 = vadd.f32 %v803, %v804
      %v806 = vrot.slane %v805, 2
      %v807 = vadd.f32 %v805, %v806
      %v808 = vrot.slane %v807, 1
      %v809 = vadd.f32 %v807, %v808
      %v810 = vmul.f32 %v809, 0.0625
      %v811 = vsub.f32 %v790, %v810
      %v812 = vsub.f32 %v791, %v810
      %v813 = vmul.f32 %v811, %v799
      %v814 = vmul.f32 %v812, %v800
      %v815 = vmul.f32 %v813, %v813
      %v816 = vmul.f32 %v814, %v814
      %v817 = vadd.f32 %v815, %v816
      %v818 = vrot.slane %v817, 4
      %v819 = vadd.f32 %v817, %v818
      %v820 = vrot.slane %v819, 2
      %v821 = vadd.f32 %v819, %v820
      %v822 = vrot.slane %v821, 1
      %v823 = vadd.f32 %v821, %v822
      %v824 = vmul.f32 %v823, 0.0625
      %v825 = vadd.f32 %v824, 1e-05
      %v826 = vrsqrt.pop %v825
      %v827 = vmul.f32 %v813, %v826
      %v828 = vmul.f32 %v814, %v826
      %v829 = vld [vmem:[%s426] sm:$0x1]
      %v831 = vlaneseq
      %v832 = vshrl.u32 %v831, 7
      %v833 = vsub.s32 0, %v832
      %v834 = vrot.slane %v829, %v833
      %v836 = vmul.f32 %v827, %v834
      %v837 = vmul.f32 %v828, %v834
      %v838 = vld [vmem:[%s429] sm:$0x1]
      %v840 = vlaneseq
      %v841 = vshrl.u32 %v840, 7
      %v842 = vsub.s32 0, %v841
      %v843 = vrot.slane %v838, %v842
      %v845 = vadd.f32 %v836, %v843
      %v846 = vadd.f32 %v837, %v843
      %847 = vst [vmem:[#allocation2] sm:$0xff] %v845
      %848 = vst [vmem:[#allocation2 + $0x8] sm:$0xff] %v846
      %v849 = vld [vmem:[%s3] sm:$0x1]
      %v850 = vpack.c.bf16 %v846, %v845
      %v852 = vsel %vm453, %v849, 0
      %854 = vmatprep.subr.bf16.mxu0 0
      %855 = vmatpush1.bf16.msra.mxu0 0
      %856 = vmatprep.subr.bf16.mxu0 0
      %857 = vmatpush1.bf16.msra.mxu0 0
      %858 = vmatprep.subr.bf16.mxu0 0
      %859 = vmatpush1.bf16.msra.mxu0 0
      %860 = vmatprep.subr.bf16.mxu0 0
      %861 = vmatpush1.bf16.msra.mxu0 0
      %862 = vmatprep.subr.bf16.mxu0 0
      %863 = vmatpush1.bf16.msra.mxu0 0
      %864 = vmatprep.subr.bf16.mxu0 0
      %865 = vmatpush1.bf16.msra.mxu0 0
      %866 = vmatprep.subr.bf16.mxu0 0
      %867 = vmatpush1.bf16.msra.mxu0 0
      %868 = vmatprep.subr.bf16.mxu0 0
      %869 = vmatpush1.bf16.msra.mxu0 %v850
      %870 = vmatprep.subr.bf16.mxu0 0
      %871 = vmatpush2.bf16.msra.mxu0 0
      %872 = vmatprep.subr.bf16.mxu0 0
      %873 = vmatpush2.bf16.msra.mxu0 0
      %874 = vmatprep.subr.bf16.mxu0 0
      %875 = vmatpush2.bf16.msra.mxu0 0
      %876 = vmatprep.subr.bf16.mxu0 0
      %877 = vmatpush2.bf16.msra.mxu0 0
      %878 = vmatprep.subr.bf16.mxu0 0
      %879 = vmatpush2.bf16.msra.mxu0 0
      %880 = vmatprep.subr.bf16.mxu0 0
      %881 = vmatpush2.bf16.msra.mxu0 0
      %882 = vmatprep.subr.bf16.mxu0 0
      %883 = vmatpush2.bf16.msra.mxu0 0
      %884 = vmatprep.subr.bf16.mxu0 0
      %885 = vmatpush2.bf16.msra.mxu0 0
      %886 = vmatprep.mubr.bf16.mxu0 0
      %887 = vmatmul.mubr.bf16.gmra.mxu0 %v852
      %v888 = vpop.f32.mrf.mxu0
      %v889 = vadd.f32 0.0, %v888
      %v890 = vpop.f32.mrf.mxu0
      %v891 = vpop.f32.mrf.mxu0
      %v892 = vpop.f32.mrf.mxu0
      %893 = vdwg.mxu0
      %894 = vst [vmem:[%s433] sm:$0x3] %v889
      %p895 = scmp.lt.s32.totalorder %s21, 2
      %s896 = scalar_select %p895, %s21, 2
      %s897 = smul.addr %s896, 2
      %s898 = scalar_lea.vmem %s10, %s897
      // Predicated region
      $region65: #{encoder_forward.1} parent=59 // pred_check
        %p899 = pneg %p279
      $region66: #{encoder_forward.1} parent=59 // pred_check_branch
        %901 = sbr.rel (%p899) target = $region68
      $region67: #{encoder_forward.1} parent=59 // pred_region
        _
      $region68: #{encoder_forward.1} parent=59 // pred_fallthru
        _
    $region60: #{encoder_forward.1} parent=5 // pred_fallthru
      _
    %p902 = scmp.le.s32.totalorder 2, %s16
    // Predicated region
    $region69: #{encoder_forward.1} parent=5 // pred_check
      %p903 = pneg %p902
    $region70: #{encoder_forward.1} parent=5 // pred_check_branch
      %905 = sbr.rel (%p903) target = $region72
    $region71: #{encoder_forward.1} parent=5 // pred_region
      %s906 = ssub.s32 %s16, 2
      // Predicated region
      $region73: #{encoder_forward.1} parent=71 // pred_check
        %p907 = pneg %p285
      $region74: #{encoder_forward.1} parent=71 // pred_check_branch
        %909 = sbr.rel (%p907) target = $region76
      $region75: #{encoder_forward.1} parent=71 // pred_region
        %p910 = scmp.lt.s32.totalorder %s22, 2
        %s911 = scalar_select %p910, %s22, 2
        %s912 = smul.addr %s911, 2
        %s913 = scalar_lea.vmem %s10, %s912
      $region76: #{encoder_forward.1} parent=71 // pred_fallthru
        _
    $region72: #{encoder_forward.1} parent=5 // pred_fallthru
      _
  $region6: #{encoder_forward.1} parent=0 // loop_footer
    %s20 = sadd.s32 1, %s16
  $region7: #{encoder_forward.1} parent=0 // loop_footer_branch
    %15 = sbr.rel target = $region3
  $region8: #{encoder_forward.1} parent=0 // loop_exit
    _

</llo_original>
